<compile_context>
chip_gen: v7x
topology: tpu7x:2x2x1
jax: 0.10.0
libtpu: 0.0.40
codegen_flags: <defaults>
</compile_context>

<pallas_src>
import functools
import math

import jax
import jax.numpy as jnp
from jax.experimental import pallas as pl
from jax.experimental.pallas import tpu as pltpu

ALPHA = 0.1   # LeakyReLU negative slope
LANE = 128    # TPU lane width


def _round_up(x, m):
    return (x + m - 1) // m * m


def _cdiv(a, b):
    return (a + b - 1) // b


def conv_block_kernel(x_ref, w_ref, b_ref, o_ref, *, alpha, row_shift, valid_rows):
    # x_ref: (T, C9p)      bf16  activation rows, H-haloed, (kd,kw,Cin) on lanes
    # w_ref: (3, C9p, Co)  bf16  per-kh weight slab (VMEM-resident across grid)
    # b_ref: (1, Co)       f32   bias
    # o_ref: (T, Co)       bf16  output rows (hh >= H rows are junk, sliced off
    #                            by the wrapper; last 2*W rows zero-filled)
    acc = None
    for kh in range(3):
        lhs = x_ref[pl.ds(kh * row_shift, valid_rows), :]       # aligned row shift
        part = jnp.dot(lhs, w_ref[kh], preferred_element_type=jnp.float32)
        acc = part if acc is None else acc + part
    out = acc + b_ref[...]                                       # bias in f32
    out = jnp.where(out >= 0, out, alpha * out)                  # LeakyReLU in f32
    o_ref[pl.ds(0, valid_rows), :] = out.astype(o_ref.dtype)
    tail = o_ref.shape[0] - valid_rows                           # 2*W junk rows
    o_ref[pl.ds(valid_rows, tail), :] = jnp.zeros((tail, o_ref.shape[1]), o_ref.dtype)


@functools.partial(jax.jit,
                   static_argnames=("alpha", "target_tile_rows", "min_grid_steps"))
def conv_block(x_ncdhw, weight, bias, alpha=ALPHA,
               target_tile_rows=2048, min_grid_steps=8):
    """ConvBlock forward.

    x_ncdhw: (N, Cin, D, H, W) float32   (PyTorch NCDHW)
    weight : (Cout, Cin, 3, 3, 3)        (PyTorch Conv3d OIDHW)
    bias   : (Cout,)
    returns: (N, Cout, D, H, W) float32
    """
    N, Cin, D, H, W = x_ncdhw.shape
    Cout = weight.shape[0]

    C9 = 9 * Cin                        # (kd, kw) taps packed on the channel axis
    C9p = _round_up(C9, 16)             # 16-aligned contraction (bf16 sublane pack)

    group_rows = (H + 2) * W            # rows per (n, d) plane, H haloed
    num_groups = N * D
    rows = num_groups * group_rows

    # ---- wrapper glue: halo pad, 9-tap (kd, kw) packing in bf16 ----
    xt = jnp.transpose(x_ncdhw, (0, 2, 3, 4, 1)).astype(jnp.bfloat16)   # NDHWC bf16
    xp = jnp.pad(xt, ((0, 0), (1, 1), (1, 1), (1, 1), (0, 0)))          # conv padding=1
    taps = [xp[:, kd:kd + D, :, kw:kw + W, :]                           # (N,D,H+2,W,Cin)
            for kd in range(3) for kw in range(3)]
    cols = jnp.stack(taps, axis=4).reshape(rows, C9)                    # (rows, 9*Cin)

    # weight: (Cout,Cin,kd,kh,kw) -> (kh, kd, kw, Cin, Cout) -> (3, 9*Cin, Cout)
    w9 = jnp.transpose(weight, (3, 2, 4, 1, 0)).reshape(3, C9, Cout)
    w9 = jnp.pad(w9, ((0, 0), (0, C9p - C9), (0, 0))).astype(jnp.bfloat16)
    b2 = bias.reshape(1, Cout).astype(jnp.float32)

    # ---- generation-aware VMEM budget & tile selection ----
    try:
        vmem_cap = int(pltpu.get_tpu_info().vmem_capacity_bytes)
    except Exception:
        vmem_cap = 128 * 1024 * 1024
    vmem_budget = int(0.8 * vmem_cap)

    def vmem_need(t_rows):
        c9_l = _round_up(C9p, LANE)
        co_l = _round_up(Cout, LANE)
        act = 2 * t_rows * c9_l * 2          # double-buffered bf16 activation block
        outb = 2 * t_rows * co_l * 2         # double-buffered bf16 output block
        wgt = 2 * 3 * c9_l * co_l * 2        # weights (Pallas double-buffers these too)
        bia = 2 * co_l * 4
        accb = t_rows * co_l * 4             # in-kernel f32 accumulator temp
        return int(1.25 * (act + outb + wgt + bia + accb))

    g_align = 16 // math.gcd(group_rows, 16)        # tile_rows multiple of 16
    g_cap = _round_up(num_groups, g_align)
    G = min(g_cap, max(g_align,
                       (target_tile_rows // group_rows) // g_align * g_align))
    want_steps = max(1, min(min_grid_steps, num_groups // g_align))
    while G > g_align and _cdiv(num_groups, G) < want_steps:   # keep pipeline / 2 TCs fed
        G -= g_align
    while G > g_align and vmem_need(G * group_rows) > vmem_budget:
        G -= g_align

    tile_rows = G * group_rows
    num_tiles = _cdiv(num_groups, G)
    total_rows = num_tiles * tile_rows
    valid_rows = tile_rows - 2 * W              # rows actually computed per tile
    vmem_limit = int(min(vmem_budget, max(8 * 1024 * 1024, vmem_need(tile_rows))))

    cols = jnp.pad(cols, ((0, total_rows - rows), (0, C9p - C9)))

    out_flat = pl.pallas_call(
        functools.partial(conv_block_kernel, alpha=alpha,
                          row_shift=W, valid_rows=valid_rows),
        out_shape=jax.ShapeDtypeStruct((total_rows, Cout), jnp.bfloat16),
        grid_spec=pltpu.PrefetchScalarGridSpec(
            num_scalar_prefetch=0,
            grid=(num_tiles,),
            in_specs=[
                pl.BlockSpec((tile_rows, C9p), lambda i: (i, 0)),   # activation rows
                pl.BlockSpec((3, C9p, Cout), lambda i: (0, 0, 0)),  # weight: resident
                pl.BlockSpec((1, Cout), lambda i: (0, 0)),          # bias: resident
            ],
            out_specs=pl.BlockSpec((tile_rows, Cout), lambda i: (i, 0)),
        ),
        compiler_params=pltpu.CompilerParams(
            dimension_semantics=("parallel",),
            vmem_limit_bytes=vmem_limit,
        ),
    )(cols, w9, b2)

    # slice off H-halo junk rows, upcast and go back to NCDHW (single fused pass)
    out = out_flat[:rows].reshape(N, D, H + 2, W, Cout)[:, :, :H]
    out = out.astype(jnp.float32)
    return jnp.transpose(out, (0, 4, 1, 2, 3))


if __name__ == "__main__":
    key = jax.random.PRNGKey(0)
    k_x, k_w, k_b = jax.random.split(key, 3)

    # Small shapes consistent with a 3-D unet conv block.
    N, Cin, Cout, D, H, W = 2, 4, 8, 8, 8, 8

    x = jax.random.normal(k_x, (N, Cin, D, H, W), jnp.float32)

    fan_in = Cin * 3 * 3 * 3
    bound = 1.0 / (fan_in ** 0.5)
    weight = jax.random.uniform(k_w, (Cout, Cin, 3, 3, 3), jnp.float32,
                                minval=-bound, maxval=bound)
    bias = jax.random.uniform(k_b, (Cout,), jnp.float32,
                              minval=-bound, maxval=bound)

    out = jax.block_until_ready(conv_block(x, weight, bias))

    # Pure-JAX f32 reference (conv + bias + leaky relu), NCDHW throughout.
    ref = jax.lax.conv_general_dilated(
        x, weight, window_strides=(1, 1, 1),
        padding=((1, 1), (1, 1), (1, 1)),
        dimension_numbers=("NCDHW", "OIDHW", "NCDHW"))
    ref = ref + bias[None, :, None, None, None]
    ref = jnp.where(ref >= 0, ref, ALPHA * ref)

    assert out.shape == (N, Cout, D, H, W)
    # MXU matmuls run in bf16 (f32 accumulation) and the kernel stores bf16,
    # so tolerance is relaxed vs. a pure-f32 path.
    err = float(jnp.max(jnp.abs(out - ref)))
    assert jnp.allclose(out, ref, atol=3e-2, rtol=3e-2), err

    print("KERNEL_OK")
</pallas_src>

<mosaic_0001>
module attributes {stable_mosaic.version = 11 : i64} {
  func.func @conv_block_kernel(%arg0: i32, %arg1: memref<160x48xbf16, #tpu.memory_space<vmem>>, %arg2: memref<3x48x8xbf16, #tpu.memory_space<vmem>>, %arg3: memref<1x8xf32, #tpu.memory_space<vmem>>, %arg4: memref<160x8xbf16, #tpu.memory_space<vmem>>) attributes {dimension_semantics = [#tpu.dimension_semantics<parallel>], iteration_bounds = array<i64: 8>, scalar_prefetch = 0 : i64, scratch_operands = 0 : i64, tpu.core_type = #tpu.core_type<tc>, window_params = [{transform_indices = @transform_0, window_bounds = array<i64: 160, 48>}, {pipeline_mode = #tpu.pipeline_mode<synchronous>, transform_indices = @transform_1, window_bounds = array<i64: 3, 48, 8>}, {pipeline_mode = #tpu.pipeline_mode<synchronous>, transform_indices = @transform_2, window_bounds = array<i64: 1, 8>}, {transform_indices = @transform_3, window_bounds = array<i64: 160, 8>}]} {
    %c0 = arith.constant 0 : index
    %c0_0 = arith.constant 0 : index
    %0 = vector.load %arg1[%c0, %c0_0] : memref<160x48xbf16, #tpu.memory_space<vmem>>, vector<144x48xbf16>
    %c0_1 = arith.constant 0 : index
    %c0_2 = arith.constant 0 : index
    %c0_3 = arith.constant 0 : index
    %1 = vector.load %arg2[%c0_1, %c0_2, %c0_3] : memref<3x48x8xbf16, #tpu.memory_space<vmem>>, vector<1x48x8xbf16>
    %2 = vector.shape_cast %1 : vector<1x48x8xbf16> to vector<48x8xbf16>
    %cst = arith.constant dense<0.000000e+00> : vector<144x8xf32>
    %3 = tpu.matmul %0, %2, %cst {dimension_numbers = #tpu.dot_dimension_numbers<[1], [0], [0], [1], [0, 0, 1, 1], [], []>} : vector<144x48xbf16>, vector<48x8xbf16>, vector<144x8xf32> -> vector<144x8xf32>
    %c8 = arith.constant 8 : index
    %c0_4 = arith.constant 0 : index
    %4 = vector.load %arg1[%c8, %c0_4] : memref<160x48xbf16, #tpu.memory_space<vmem>>, vector<144x48xbf16>
    %c1 = arith.constant 1 : index
    %c0_5 = arith.constant 0 : index
    %c0_6 = arith.constant 0 : index
    %5 = vector.load %arg2[%c1, %c0_5, %c0_6] : memref<3x48x8xbf16, #tpu.memory_space<vmem>>, vector<1x48x8xbf16>
    %6 = vector.shape_cast %5 : vector<1x48x8xbf16> to vector<48x8xbf16>
    %cst_7 = arith.constant dense<0.000000e+00> : vector<144x8xf32>
    %7 = tpu.matmul %4, %6, %cst_7 {dimension_numbers = #tpu.dot_dimension_numbers<[1], [0], [0], [1], [0, 0, 1, 1], [], []>} : vector<144x48xbf16>, vector<48x8xbf16>, vector<144x8xf32> -> vector<144x8xf32>
    %8 = arith.addf %3, %7 : vector<144x8xf32>
    %c16 = arith.constant 16 : index
    %c0_8 = arith.constant 0 : index
    %9 = vector.load %arg1[%c16, %c0_8] : memref<160x48xbf16, #tpu.memory_space<vmem>>, vector<144x48xbf16>
    %c2 = arith.constant 2 : index
    %c0_9 = arith.constant 0 : index
    %c0_10 = arith.constant 0 : index
    %10 = vector.load %arg2[%c2, %c0_9, %c0_10] : memref<3x48x8xbf16, #tpu.memory_space<vmem>>, vector<1x48x8xbf16>
    %11 = vector.shape_cast %10 : vector<1x48x8xbf16> to vector<48x8xbf16>
    %cst_11 = arith.constant dense<0.000000e+00> : vector<144x8xf32>
    %12 = tpu.matmul %9, %11, %cst_11 {dimension_numbers = #tpu.dot_dimension_numbers<[1], [0], [0], [1], [0, 0, 1, 1], [], []>} : vector<144x48xbf16>, vector<48x8xbf16>, vector<144x8xf32> -> vector<144x8xf32>
    %13 = arith.addf %8, %12 : vector<144x8xf32>
    %c0_12 = arith.constant 0 : index
    %c0_13 = arith.constant 0 : index
    %14 = vector.load %arg3[%c0_12, %c0_13] : memref<1x8xf32, #tpu.memory_space<vmem>>, vector<1x8xf32>
    %15 = vector.broadcast %14 : vector<1x8xf32> to vector<144x8xf32>
    %16 = arith.addf %13, %15 : vector<144x8xf32>
    %cst_14 = arith.constant 0.000000e+00 : f32
    %17 = vector.broadcast %cst_14 : f32 to vector<144x8xf32>
    %18 = arith.cmpf oge, %16, %17 : vector<144x8xf32>
    %cst_15 = arith.constant 1.000000e-01 : f32
    %19 = vector.broadcast %cst_15 : f32 to vector<144x8xf32>
    %20 = arith.mulf %19, %16 : vector<144x8xf32>
    %21 = arith.select %18, %16, %20 : vector<144x8xi1>, vector<144x8xf32>
    %22 = arith.truncf %21 : vector<144x8xf32> to vector<144x8xbf16>
    %c0_16 = arith.constant 0 : index
    %c0_17 = arith.constant 0 : index
    %23 = vector.load %arg4[%c0_16, %c0_17] : memref<160x8xbf16, #tpu.memory_space<vmem>>, vector<144x8xbf16>
    tpu.vector_store %arg4[%c0_16, %c0_17], %22 {strides = array<i32>} : memref<160x8xbf16, #tpu.memory_space<vmem>>, vector<144x8xbf16>,
    %cst_18 = arith.constant 0.000000e+00 : bf16
    %24 = vector.broadcast %cst_18 : bf16 to vector<16x8xbf16>
    %c144 = arith.constant 144 : index
    %c0_19 = arith.constant 0 : index
    %25 = vector.load %arg4[%c144, %c0_19] : memref<160x8xbf16, #tpu.memory_space<vmem>>, vector<16x8xbf16>
    tpu.vector_store %arg4[%c144, %c0_19], %24 {strides = array<i32>} : memref<160x8xbf16, #tpu.memory_space<vmem>>, vector<16x8xbf16>,
    return
  }
  func.func @transform_0(%arg0: i32) -> (i32, i32) {
    %c0_i32 = arith.constant 0 : i32
    %c0_i32_0 = arith.constant 0 : i32
    return %arg0, %c0_i32 : i32, i32
  }
  func.func @transform_1(%arg0: i32) -> (i32, i32, i32) {
    %c0_i32 = arith.constant 0 : i32
    %c0_i32_0 = arith.constant 0 : i32
    %c0_i32_1 = arith.constant 0 : i32
    %c0_i32_2 = arith.constant 0 : i32
    return %c0_i32, %c0_i32_0, %c0_i32_1 : i32, i32, i32
  }
  func.func @transform_2(%arg0: i32) -> (i32, i32) {
    %c0_i32 = arith.constant 0 : i32
    %c0_i32_0 = arith.constant 0 : i32
    %c0_i32_1 = arith.constant 0 : i32
    return %c0_i32, %c0_i32_0 : i32, i32
  }
  func.func @transform_3(%arg0: i32) -> (i32, i32) {
    %c0_i32 = arith.constant 0 : i32
    %c0_i32_0 = arith.constant 0 : i32
    return %arg0, %c0_i32 : i32, i32
  }
}

</mosaic_0001>

<llo_original>
// kernel: conv_block.1
$region0: #{conv_block.1}
  #allocation0 [shape = 'u32[]', space=smem, size = 0x4, offset = 0x4, fixed_abs, tag = 'smem constant byte address 0x4 - core index']
  #allocation1 [shape = 'u32[144,128]{1,0:T(1,128)}', space=vmem, size = 0x12000, scoped, tag = 'internal scratch']
  %s0 = inlined_call_operand.vmem [shape: bf16[1280,48], index: 0, kind: input, shape index: {}]
  %s1 = inlined_call_operand.vmem [shape: bf16[3,48,8], index: 1, kind: input, shape index: {}]
  %s2 = inlined_call_operand.vmem [shape: f32[1,8], index: 2, kind: input, shape index: {}]
  %s3 = inlined_call_operand.vmem [shape: bf16[1280,8], index: 3, kind: output, shape index: {}]
  %s4 = sld [smem:[#allocation0]]
  $region45: #{conv_block.1} parent=0
    _
  %s6 = ssub.s32 1, %s4
  %s7 = scalar_select 0, %s6, %s4
  loop: start=0, step=1, limit=10
  $region2: #{conv_block.1} parent=0 // loop_pre_header
    _
  $region3: #{conv_block.1} parent=0 // loop_header
    %s9 = sphi 0, %s13
    %p10 = scmp.ge.s32.totalorder %s9, 10
    %s19 = sphi 0, %s21
    %s22 = sphi 0, %s19
    %s23 = sphi 0, %s22
    %s39 = sphi 0, %s23
    %s43 = sphi 0, %s43
    %s45 = sphi 0, %s43
    %s46 = sphi 0, %s45
    %s60 = sphi 0, %s46
    %s64 = sphi 0, %s64
    %s66 = sphi 0, %s64
    %s67 = sphi 0, %s66
    %s81 = sphi 0, %s67
    %s87 = sphi 0, %s89
    %s90 = sphi 0, %s87
    %s91 = sphi 0, %s90
    %s107 = sphi 0, %s91
  $region4: #{conv_block.1} parent=0 // loop_header_branch
    %12 = sbr.rel (%p10) target = $region8
  $region5: #{conv_block.1} parent=0 // loop_body
    %s14 = ssub.s32 %s9, 1
    %s15 = ssub.s32 %s9, 2
    %s16 = sadd.s32 %s9, 1
    %s17 = ssub.s32 %s9, %s16
    %p18 = scmp.eq.s32.totalorder %s17, 0
    %s20 = sadd.s32 %s19, 1
    %s21 = scalar_select %p18, %s19, %s20
    %p24 = pneg %p18
    %p25 = scmp.eq.s32.totalorder %s9, 7
    %p26 = por %p24, %p25
    %p27 = scmp.ne.s32.totalorder %s19, %s22
    %p28 = scmp.eq.s32.totalorder %s9, 0
    %p29 = por %p27, %p28
    %p30 = scmp.ne.s32.totalorder %s19, %s22
    %p31 = scmp.eq.s32.totalorder %s14, 7
    %p32 = por %p30, %p31
    %p33 = scmp.ne.s32.totalorder %s22, %s23
    %p34 = scmp.eq.s32.totalorder %s14, 0
    %p35 = por %p33, %p34
    %p36 = scmp.ne.s32.totalorder %s22, %s23
    %p37 = scmp.eq.s32.totalorder %s15, 7
    %p38 = por %p36, %p37
    %p40 = scmp.ne.s32.totalorder %s23, %s39
    %p41 = scmp.eq.s32.totalorder %s15, 0
    %p42 = por %p40, %p41
    %s44 = sadd.s32 %s43, 1
    %p47 = scmp.eq.s32.totalorder %s9, 7
    %p48 = scmp.ne.s32.totalorder %s43, %s45
    %p49 = scmp.eq.s32.totalorder %s9, 0
    %p50 = por %p48, %p49
    %p51 = scmp.ne.s32.totalorder %s43, %s45
    %p52 = scmp.eq.s32.totalorder %s14, 7
    %p53 = por %p51, %p52
    %p54 = scmp.ne.s32.totalorder %s45, %s46
    %p55 = scmp.eq.s32.totalorder %s14, 0
    %p56 = por %p54, %p55
    %p57 = scmp.ne.s32.totalorder %s45, %s46
    %p58 = scmp.eq.s32.totalorder %s15, 7
    %p59 = por %p57, %p58
    %p61 = scmp.ne.s32.totalorder %s46, %s60
    %p62 = scmp.eq.s32.totalorder %s15, 0
    %p63 = por %p61, %p62
    %s65 = sadd.s32 %s64, 1
    %p68 = scmp.eq.s32.totalorder %s9, 7
    %p69 = scmp.ne.s32.totalorder %s64, %s66
    %p70 = scmp.eq.s32.totalorder %s9, 0
    %p71 = por %p69, %p70
    %p72 = scmp.ne.s32.totalorder %s64, %s66
    %p73 = scmp.eq.s32.totalorder %s14, 7
    %p74 = por %p72, %p73
    %p75 = scmp.ne.s32.totalorder %s66, %s67
    %p76 = scmp.eq.s32.totalorder %s14, 0
    %p77 = por %p75, %p76
    %p78 = scmp.ne.s32.totalorder %s66, %s67
    %p79 = scmp.eq.s32.totalorder %s15, 7
    %p80 = por %p78, %p79
    %p82 = scmp.ne.s32.totalorder %s67, %s81
    %p83 = scmp.eq.s32.totalorder %s15, 0
    %p84 = por %p82, %p83
    %s85 = ssub.s32 %s9, %s16
    %p86 = scmp.eq.s32.totalorder %s85, 0
    %s88 = sadd.s32 %s87, 1
    %s89 = scalar_select %p86, %s87, %s88
    %p92 = pneg %p86
    %p93 = scmp.eq.s32.totalorder %s9, 7
    %p94 = por %p92, %p93
    %p95 = scmp.ne.s32.totalorder %s87, %s90
    %p96 = scmp.eq.s32.totalorder %s9, 0
    %p97 = por %p95, %p96
    %p98 = scmp.ne.s32.totalorder %s87, %s90
    %p99 = scmp.eq.s32.totalorder %s14, 7
    %p100 = por %p98, %p99
    %p101 = scmp.ne.s32.totalorder %s90, %s91
    %p102 = scmp.eq.s32.totalorder %s14, 0
    %p103 = por %p101, %p102
    %p104 = scmp.ne.s32.totalorder %s90, %s91
    %p105 = scmp.eq.s32.totalorder %s15, 7
    %p106 = por %p104, %p105
    %p108 = scmp.ne.s32.totalorder %s91, %s107
    %p109 = scmp.eq.s32.totalorder %s15, 0
    %p110 = por %p108, %p109
    %p111 = scmp.le.s32.totalorder 1, %s9
    %p112 = scmp.lt.s32.totalorder %s9, 9
    %p113 = pnand %p111, %p112
    %p114 = pneg %p113
    // Predicated region
    $region9: #{conv_block.1} parent=5 // pred_check
      _
    $region10: #{conv_block.1} parent=5 // pred_check_branch
      %116 = sbr.rel (%p113) target = $region12
    $region11: #{conv_block.1} parent=5 // pred_region
      %s117 = ssub.s32 %s9, 1
      // Predicated region
      $region13: #{conv_block.1} parent=11 // pred_check
        %p118 = pneg %p56
      $region14: #{conv_block.1} parent=11 // pred_check_branch
        %120 = sbr.rel (%p118) target = $region16
      $region15: #{conv_block.1} parent=11 // pred_region
        _
      $region16: #{conv_block.1} parent=11 // pred_fallthru
        _
      // Predicated region
      $region17: #{conv_block.1} parent=11 // pred_check
        %p121 = pneg %p77
      $region18: #{conv_block.1} parent=11 // pred_check_branch
        %123 = sbr.rel (%p121) target = $region20
      $region19: #{conv_block.1} parent=11 // pred_region
        _
      $region20: #{conv_block.1} parent=11 // pred_fallthru
        _
    $region12: #{conv_block.1} parent=5 // pred_fallthru
      _
    %p124 = scmp.lt.s32.totalorder %s9, 8
    // Predicated region
    $region21: #{conv_block.1} parent=5 // pred_check
      %p125 = pneg %p124
    $region22: #{conv_block.1} parent=5 // pred_check_branch
      %127 = sbr.rel (%p125) target = $region24
    $region23: #{conv_block.1} parent=5 // pred_region
      // Predicated region
      $region25: #{conv_block.1} parent=23 // pred_check
        %p128 = pneg %p29
      $region26: #{conv_block.1} parent=23 // pred_check_branch
        %130 = sbr.rel (%p128) target = $region28
      $region27: #{conv_block.1} parent=23 // pred_region
        %s131 = smul.u32 20, %s9
        %p132 = scmp.lt.s32.totalorder %s131, 159
        %s133 = scalar_select %p132, %s131, 159
        %s134 = smul.addr %s133, 4
        %s135 = scalar_lea.vmem %s0, %s134
        %s136 = smul.u32 20, %s9
      $region28: #{conv_block.1} parent=23 // pred_fallthru
        _
    $region24: #{conv_block.1} parent=5 // pred_fallthru
      _
    %p137 = scmp.le.s32.totalorder 1, %s9
    %p138 = scmp.lt.s32.totalorder %s9, 9
    %p139 = pnand %p137, %p138
    %p140 = pneg %p139
    // Predicated region
    $region29: #{conv_block.1} parent=5 // pred_check
      _
    $region30: #{conv_block.1} parent=5 // pred_check_branch
      %142 = sbr.rel (%p139) target = $region32
    $region31: #{conv_block.1} parent=5 // pred_region
      %s143 = ssub.s32 %s9, 1
      %s144 = smul.u32 20, %s14
      %p145 = scmp.lt.s32.totalorder %s144, 159
      %s146 = scalar_select %p145, %s144, 159
      %s147 = smul.addr %s146, 4
      %s148 = scalar_lea.vmem %s0, %s147
      %p149 = pneg %p35
      %p150 = pneg %p32
      %p151 = pneg %p56
      %p152 = pneg %p53
      %p153 = pneg %p77
      %p154 = pneg %p74
      %p155 = pneg %p103
      %p156 = pneg %p100
      %s157 = smul.u32 20, %s14
      %p158 = scmp.lt.s32.totalorder %s157, 159
      %s159 = scalar_select %p158, %s157, 159
      %s160 = smul.addr %s159, 4
      %s161 = scalar_lea.vmem %s3, %s160
      %s162 = smul.u32 20, %s14
      %p163 = scmp.lt.s32.totalorder %s162, 159
      %s164 = scalar_select %p163, %s162, 159
      %s165 = smul.addr %s164, 4
      %s166 = scalar_lea.vmem %s0, %s165
      %s167 = smul.u32 20, %s14
      %s168 = smul.u32 20, %s14
      %p169 = scmp.lt.s32.totalorder %s168, 159
      %s170 = scalar_select %p169, %s168, 159
      %s171 = smul.addr %s170, 4
      %s172 = scalar_lea.vmem %s3, %s171
      %s173 = smul.u32 20, %s14
      %v175 = vld [vmem:[%s166] sm:$0xf]
      %v176 = vld [vmem:[%s166 + $0x4] sm:$0xf]
      %v177 = vld [vmem:[%s166 + $0x8] sm:$0xf]
      %v178 = vld [vmem:[%s166 + $0xc] sm:$0xf]
      %v179 = vld [vmem:[%s166 + $0x10] sm:$0xf]
      %v180 = vld [vmem:[%s166 + $0x14] sm:$0xf]
      %v181 = vld [vmem:[%s166 + $0x18] sm:$0xf]
      %v182 = vld [vmem:[%s166 + $0x1c] sm:$0xf]
      %v183 = vld [vmem:[%s166 + $0x20] sm:$0xf]
      %v184 = vld [vmem:[%s166 + $0x24] sm:$0xf]
      %v185 = vld [vmem:[%s166 + $0x28] sm:$0xf]
      %v186 = vld [vmem:[%s166 + $0x2c] sm:$0xf]
      %v187 = vld [vmem:[%s166 + $0x30] sm:$0xf]
      %v188 = vld [vmem:[%s166 + $0x34] sm:$0xf]
      %v189 = vld [vmem:[%s166 + $0x38] sm:$0xf]
      %v190 = vld [vmem:[%s166 + $0x3c] sm:$0xf]
      %v191 = vld [vmem:[%s166 + $0x40] sm:$0xf]
      %v192 = vld [vmem:[%s166 + $0x44] sm:$0xf]
      %v193 = vld [vmem:[%s1] sm:$0xf]
      %v194 = vld [vmem:[%s1 + $0x4] sm:$0xf]
      %v195 = vld [vmem:[%s1 + $0x8] sm:$0xf]
      %v196 = vld [vmem:[%s1 + $0xc] sm:$0xf]
      %v197 = vld [vmem:[%s1 + $0x10] sm:$0xf]
      %v198 = vld [vmem:[%s1 + $0x14] sm:$0xf]
      %v199 = vld [vmem:[%s166 + $0x48] sm:$0xf]
      %s200 = scalar_lea.vmem %s1, 24
      %v201 = vld [vmem:[%s200] sm:$0xf]
      %v202 = vld [vmem:[%s200 + $0x4] sm:$0xf]
      %v203 = vld [vmem:[%s200 + $0x8] sm:$0xf]
      %v204 = vld [vmem:[%s200 + $0xc] sm:$0xf]
      %v205 = vld [vmem:[%s200 + $0x10] sm:$0xf]
      %v206 = vld [vmem:[%s200 + $0x14] sm:$0xf]
      %v225 = vunpack.c.l.b16 %v176
      %v226 = vunpack.c.l.b16 %v177
      %v227 = vunpack.c.l.b16 %v178
      %v228 = vunpack.c.l.b16 %v179
      %v229 = vunpack.c.l.b16 %v180
      %v230 = vunpack.c.l.b16 %v181
      %v231 = vunpack.c.l.b16 %v182
      %v232 = vunpack.c.l.b16 %v183
      %v233 = vunpack.c.l.b16 %v184
      %v234 = vunpack.c.l.b16 %v185
      %v235 = vunpack.c.l.b16 %v186
      %v236 = vunpack.c.l.b16 %v187
      %v237 = vunpack.c.l.b16 %v188
      %v238 = vunpack.c.l.b16 %v189
      %v239 = vunpack.c.l.b16 %v190
      %v240 = vunpack.c.l.b16 %v191
      %v241 = vunpack.c.l.b16 %v192
      %v242 = vunpack.c.l.b16 %v199
      %v243 = vpack.c.b16 %v226, %v225
      %v244 = vpack.c.b16 %v228, %v227
      %v245 = vpack.c.b16 %v230, %v229
      %v246 = vpack.c.b16 %v232, %v231
      %v247 = vpack.c.b16 %v234, %v233
      %v248 = vpack.c.b16 %v236, %v235
      %v249 = vpack.c.b16 %v238, %v237
      %v250 = vpack.c.b16 %v240, %v239
      %v251 = vpack.c.b16 %v242, %v241
      %v258 = vunpack.c.l.b16 %v201
      %v259 = vunpack.c.l.b16 %v202
      %v260 = vunpack.c.l.b16 %v203
      %v261 = vunpack.c.l.b16 %v204
      %v262 = vunpack.c.l.b16 %v205
      %v263 = vunpack.c.l.b16 %v206
      %v264 = vpack.c.b16 %v259, %v258
      %v265 = vpack.c.b16 %v261, %v260
      %v266 = vpack.c.b16 %v263, %v262
      %vm270 = vcmask 392192
      %v272 = vsel %vm270, %v243, 0
      %v275 = vsel %vm270, %v244, 0
      %v278 = vsel %vm270, %v245, 0
      %v281 = vsel %vm270, %v246, 0
      %v284 = vsel %vm270, %v247, 0
      %v287 = vsel %vm270, %v248, 0
      %v290 = vsel %vm270, %v249, 0
      %v293 = vsel %vm270, %v250, 0
      %v296 = vsel %vm270, %v251, 0
      %298 = vmatprep.subr.bf16.mxu0 0
      %299 = vmatpush1.bf16.msra.mxu0 %v264
      %300 = vmatprep.subr.bf16.mxu0 0
      %301 = vmatpush1.bf16.msra.mxu0 %v265
      %302 = vmatprep.subr.bf16.mxu0 0
      %303 = vmatpush1.bf16.msra.mxu0 %v266
      %304 = vmatprep.subr.bf16.mxu0 0
      %305 = vmatpush1.bf16.msra.mxu0 0
      %306 = vmatprep.subr.bf16.mxu0 0
      %307 = vmatpush1.bf16.msra.mxu0 0
      %308 = vmatprep.subr.bf16.mxu0 0
      %309 = vmatpush1.bf16.msra.mxu0 0
      %310 = vmatprep.subr.bf16.mxu0 0
      %311 = vmatpush1.bf16.msra.mxu0 0
      %312 = vmatprep.subr.bf16.mxu0 0
      %313 = vmatpush1.bf16.msra.mxu0 0
      %314 = vmatprep.subr.bf16.mxu0 0
      %315 = vmatpush1.bf16.msra.mxu0 0
      %316 = vmatprep.subr.bf16.mxu0 0
      %317 = vmatpush1.bf16.msra.mxu0 0
      %318 = vmatprep.subr.bf16.mxu0 0
      %319 = vmatpush1.bf16.msra.mxu0 0
      %320 = vmatprep.subr.bf16.mxu0 0
      %321 = vmatpush1.bf16.msra.mxu0 0
      %322 = vmatprep.subr.bf16.mxu0 0
      %323 = vmatpush1.bf16.msra.mxu0 0
      %324 = vmatprep.subr.bf16.mxu0 0
      %325 = vmatpush1.bf16.msra.mxu0 0
      %326 = vmatprep.subr.bf16.mxu0 0
      %327 = vmatpush1.bf16.msra.mxu0 0
      %328 = vmatprep.subr.bf16.mxu0 0
      %329 = vmatpush1.bf16.msra.mxu0 0
      %330 = vmatprep.mubr.bf16.mxu0 0
      %331 = vmatmul.mubr.bf16.gmra.mrb[0].mxu0 %v272
      %v332 = vpop.f32.mrb[0].mxu0
      %v333 = vadd.f32 0.0, %v332
      %v334 = vpop.f32.mrb[0].mxu0
      %v335 = vpop.f32.mrb[0].mxu0
      %v336 = vadd.f32 0.0, %v335
      %v337 = vpop.f32.mrb[0].mxu0
      %338 = vmatprep.mubr.bf16.mxu0 0
      %339 = vmatmul.mubr.bf16.gmra.mrb[0].mxu0 %v275
      %v340 = vpop.f32.mrb[0].mxu0
      %v341 = vadd.f32 0.0, %v340
      %v342 = vpop.f32.mrb[0].mxu0
      %v343 = vpop.f32.mrb[0].mxu0
      %v344 = vadd.f32 0.0, %v343
      %v345 = vpop.f32.mrb[0].mxu0
      %346 = vmatprep.mubr.bf16.mxu0 0
      %347 = vmatmul.mubr.bf16.gmra.mrb[0].mxu0 %v278
      %v348 = vpop.f32.mrb[0].mxu0
      %v349 = vadd.f32 0.0, %v348
      %v350 = vpop.f32.mrb[0].mxu0
      %v351 = vpop.f32.mrb[0].mxu0
      %v352 = vadd.f32 0.0, %v351
      %v353 = vpop.f32.mrb[0].mxu0
      %354 = vmatprep.mubr.bf16.mxu0 0
      %355 = vmatmul.mubr.bf16.gmra.mrb[0].mxu0 %v281
      %v356 = vpop.f32.mrb[0].mxu0
      %v357 = vadd.f32 0.0, %v356
      %v358 = vpop.f32.mrb[0].mxu0
      %v359 = vpop.f32.mrb[0].mxu0
      %v360 = vadd.f32 0.0, %v359
      %v361 = vpop.f32.mrb[0].mxu0
      %362 = vmatprep.mubr.bf16.mxu0 0
      %363 = vmatmul.mubr.bf16.gmra.mrb[0].mxu0 %v284
      %v364 = vpop.f32.mrb[0].mxu0
      %v365 = vadd.f32 0.0, %v364
      %v366 = vpop.f32.mrb[0].mxu0
      %v367 = vpop.f32.mrb[0].mxu0
      %v368 = vadd.f32 0.0, %v367
      %v369 = vpop.f32.mrb[0].mxu0
      %370 = vmatprep.mubr.bf16.mxu0 0
      %371 = vmatmul.mubr.bf16.gmra.mrb[0].mxu0 %v287
      %v372 = vpop.f32.mrb[0].mxu0
      %v373 = vadd.f32 0.0, %v372
      %v374 = vpop.f32.mrb[0].mxu0
      %v375 = vpop.f32.mrb[0].mxu0
      %v376 = vadd.f32 0.0, %v375
      %v377 = vpop.f32.mrb[0].mxu0
      %378 = vmatprep.mubr.bf16.mxu0 0
      %379 = vmatmul.mubr.bf16.gmra.mrb[0].mxu0 %v290
      %v380 = vpop.f32.mrb[0].mxu0
      %v381 = vadd.f32 0.0, %v380
      %v382 = vpop.f32.mrb[0].mxu0
      %v383 = vpop.f32.mrb[0].mxu0
      %v384 = vadd.f32 0.0, %v383
      %v385 = vpop.f32.mrb[0].mxu0
      %386 = vmatprep.mubr.bf16.mxu0 0
      %387 = vmatmul.mubr.bf16.gmra.mrb[0].mxu0 %v293
      %v388 = vpop.f32.mrb[0].mxu0
      %v389 = vadd.f32 0.0, %v388
      %v390 = vpop.f32.mrb[0].mxu0
      %v391 = vpop.f32.mrb[0].mxu0
      %v392 = vadd.f32 0.0, %v391
      %v393 = vpop.f32.mrb[0].mxu0
      %394 = vmatprep.mubr.bf16.mxu0 0
      %395 = vmatmul.mubr.bf16.gmra.mrb[0].mxu0 %v296
      %v396 = vpop.f32.mrb[0].mxu0
      %v397 = vadd.f32 0.0, %v396
      %v398 = vpop.f32.mrb[0].mxu0
      %v399 = vpop.f32.mrb[0].mxu0
      %v400 = vadd.f32 0.0, %v399
      %v401 = vpop.f32.mrb[0].mxu0
      %402 = vdwg.mxu0
      %v404 = vunpack.c.l.b16 %v175
      %v405 = vpack.c.b16 %v225, %v404
      %v406 = vpack.c.b16 %v227, %v226
      %v407 = vpack.c.b16 %v229, %v228
      %v408 = vpack.c.b16 %v231, %v230
      %v409 = vpack.c.b16 %v233, %v232
      %v410 = vpack.c.b16 %v235, %v234
      %v411 = vpack.c.b16 %v237, %v236
      %v412 = vpack.c.b16 %v239, %v238
      %v413 = vpack.c.b16 %v241, %v240
      %v420 = vunpack.c.l.b16 %v193
      %v421 = vunpack.c.l.b16 %v194
      %v422 = vunpack.c.l.b16 %v195
      %v423 = vunpack.c.l.b16 %v196
      %v424 = vunpack.c.l.b16 %v197
      %v425 = vunpack.c.l.b16 %v198
      %v426 = vpack.c.b16 %v421, %v420
      %v427 = vpack.c.b16 %v423, %v422
      %v428 = vpack.c.b16 %v425, %v424
      %v433 = vsel %vm270, %v405, 0
      %v436 = vsel %vm270, %v406, 0
      %v439 = vsel %vm270, %v407, 0
      %v442 = vsel %vm270, %v408, 0
      %v445 = vsel %vm270, %v409, 0
      %v448 = vsel %vm270, %v410, 0
      %v451 = vsel %vm270, %v411, 0
      %v454 = vsel %vm270, %v412, 0
      %v457 = vsel %vm270, %v413, 0
      %459 = vmatprep.subr.bf16.mxu0 0
      %460 = vmatpush1.bf16.msra.mxu0 %v426
      %461 = vmatprep.subr.bf16.mxu0 0
      %462 = vmatpush1.bf16.msra.mxu0 %v427
      %463 = vmatprep.subr.bf16.mxu0 0
      %464 = vmatpush1.bf16.msra.mxu0 %v428
      %465 = vmatprep.subr.bf16.mxu0 0
      %466 = vmatpush1.bf16.msra.mxu0 0
      %467 = vmatprep.subr.bf16.mxu0 0
      %468 = vmatpush1.bf16.msra.mxu0 0
      %469 = vmatprep.subr.bf16.mxu0 0
      %470 = vmatpush1.bf16.msra.mxu0 0
      %471 = vmatprep.subr.bf16.mxu0 0
      %472 = vmatpush1.bf16.msra.mxu0 0
      %473 = vmatprep.subr.bf16.mxu0 0
      %474 = vmatpush1.bf16.msra.mxu0 0
      %475 = vmatprep.subr.bf16.mxu0 0
      %476 = vmatpush1.bf16.msra.mxu0 0
      %477 = vmatprep.subr.bf16.mxu0 0
      %478 = vmatpush1.bf16.msra.mxu0 0
      %479 = vmatprep.subr.bf16.mxu0 0
      %480 = vmatpush1.bf16.msra.mxu0 0
      %481 = vmatprep.subr.bf16.mxu0 0
      %482 = vmatpush1.bf16.msra.mxu0 0
      %483 = vmatprep.subr.bf16.mxu0 0
      %484 = vmatpush1.bf16.msra.mxu0 0
      %485 = vmatprep.subr.bf16.mxu0 0
      %486 = vmatpush1.bf16.msra.mxu0 0
      %487 = vmatprep.subr.bf16.mxu0 0
      %488 = vmatpush1.bf16.msra.mxu0 0
      %489 = vmatprep.subr.bf16.mxu0 0
      %490 = vmatpush1.bf16.msra.mxu0 0
      %491 = vmatprep.mubr.bf16.mxu0 0
      %492 = vmatmul.mubr.bf16.gmra.mrb[0].mxu0 %v433
      %v493 = vpop.f32.mrb[0].mxu0
      %v494 = vadd.f32 %v333, %v493
      %v495 = vpop.f32.mrb[0].mxu0
      %v496 = vpop.f32.mrb[0].mxu0
      %v497 = vadd.f32 %v336, %v496
      %v498 = vpop.f32.mrb[0].mxu0
      %499 = vmatprep.mubr.bf16.mxu0 0
      %500 = vmatmul.mubr.bf16.gmra.mrb[0].mxu0 %v436
      %v501 = vpop.f32.mrb[0].mxu0
      %v502 = vadd.f32 %v341, %v501
      %v503 = vpop.f32.mrb[0].mxu0
      %v504 = vpop.f32.mrb[0].mxu0
      %v505 = vadd.f32 %v344, %v504
      %v506 = vpop.f32.mrb[0].mxu0
      %507 = vmatprep.mubr.bf16.mxu0 0
      %508 = vmatmul.mubr.bf16.gmra.mrb[0].mxu0 %v439
      %v509 = vpop.f32.mrb[0].mxu0
      %v510 = vadd.f32 %v349, %v509
      %v511 = vpop.f32.mrb[0].mxu0
      %v512 = vpop.f32.mrb[0].mxu0
      %v513 = vadd.f32 %v352, %v512
      %v514 = vpop.f32.mrb[0].mxu0
      %515 = vmatprep.mubr.bf16.mxu0 0
      %516 = vmatmul.mubr.bf16.gmra.mrb[0].mxu0 %v442
      %v517 = vpop.f32.mrb[0].mxu0
      %v518 = vadd.f32 %v357, %v517
      %v519 = vpop.f32.mrb[0].mxu0
      %v520 = vpop.f32.mrb[0].mxu0
      %v521 = vadd.f32 %v360, %v520
      %v522 = vpop.f32.mrb[0].mxu0
      %523 = vmatprep.mubr.bf16.mxu0 0
      %524 = vmatmul.mubr.bf16.gmra.mrb[0].mxu0 %v445
      %v525 = vpop.f32.mrb[0].mxu0
      %v526 = vadd.f32 %v365, %v525
      %v527 = vpop.f32.mrb[0].mxu0
      %v528 = vpop.f32.mrb[0].mxu0
      %v529 = vadd.f32 %v368, %v528
      %v530 = vpop.f32.mrb[0].mxu0
      %531 = vmatprep.mubr.bf16.mxu0 0
      %532 = vmatmul.mubr.bf16.gmra.mrb[0].mxu0 %v448
      %v533 = vpop.f32.mrb[0].mxu0
      %v534 = vadd.f32 %v373, %v533
      %v535 = vpop.f32.mrb[0].mxu0
      %v536 = vpop.f32.mrb[0].mxu0
      %v537 = vadd.f32 %v376, %v536
      %v538 = vpop.f32.mrb[0].mxu0
      %539 = vmatprep.mubr.bf16.mxu0 0
      %540 = vmatmul.mubr.bf16.gmra.mrb[0].mxu0 %v451
      %v541 = vpop.f32.mrb[0].mxu0
      %v542 = vadd.f32 %v381, %v541
      %v543 = vpop.f32.mrb[0].mxu0
      %v544 = vpop.f32.mrb[0].mxu0
      %v545 = vadd.f32 %v384, %v544
      %v546 = vpop.f32.mrb[0].mxu0
      %547 = vmatprep.mubr.bf16.mxu0 0
      %548 = vmatmul.mubr.bf16.gmra.mrb[0].mxu0 %v454
      %v549 = vpop.f32.mrb[0].mxu0
      %v550 = vadd.f32 %v389, %v549
      %v551 = vpop.f32.mrb[0].mxu0
      %v552 = vpop.f32.mrb[0].mxu0
      %v553 = vadd.f32 %v392, %v552
      %v554 = vpop.f32.mrb[0].mxu0
      %555 = vmatprep.mubr.bf16.mxu0 0
      %556 = vmatmul.mubr.bf16.gmra.mrb[0].mxu0 %v457
      %v557 = vpop.f32.mrb[0].mxu0
      %v558 = vadd.f32 %v397, %v557
      %v559 = vpop.f32.mrb[0].mxu0
      %v560 = vpop.f32.mrb[0].mxu0
      %v561 = vadd.f32 %v400, %v560
      %v562 = vpop.f32.mrb[0].mxu0
      %563 = vdwg.mxu0
      %v564 = vld [vmem:[%s166 + $0x8] sm:$0xf]
      %v565 = vld [vmem:[%s166 + $0xc] sm:$0xf]
      %v566 = vld [vmem:[%s166 + $0x10] sm:$0xf]
      %v567 = vld [vmem:[%s166 + $0x14] sm:$0xf]
      %v568 = vld [vmem:[%s166 + $0x18] sm:$0xf]
      %v569 = vld [vmem:[%s166 + $0x1c] sm:$0xf]
      %v570 = vld [vmem:[%s166 + $0x20] sm:$0xf]
      %v571 = vld [vmem:[%s166 + $0x24] sm:$0xf]
      %v572 = vld [vmem:[%s166 + $0x28] sm:$0xf]
      %v573 = vld [vmem:[%s166 + $0x2c] sm:$0xf]
      %v574 = vld [vmem:[%s166 + $0x30] sm:$0xf]
      %v575 = vld [vmem:[%s166 + $0x34] sm:$0xf]
      %v576 = vld [vmem:[%s166 + $0x38] sm:$0xf]
      %v577 = vld [vmem:[%s166 + $0x3c] sm:$0xf]
      %v578 = vld [vmem:[%s166 + $0x40] sm:$0xf]
      %v579 = vld [vmem:[%s166 + $0x44] sm:$0xf]
      %v580 = vld [vmem:[%s166 + $0x48] sm:$0xf]
      %v581 = vld [vmem:[%s166 + $0x4c] sm:$0xf]
      %s582 = scalar_lea.vmem %s1, 48
      %v583 = vld [vmem:[%s582] sm:$0xf]
      %v584 = vld [vmem:[%s582 + $0x4] sm:$0xf]
      %v585 = vld [vmem:[%s582 + $0x8] sm:$0xf]
      %v586 = vld [vmem:[%s582 + $0xc] sm:$0xf]
      %v587 = vld [vmem:[%s582 + $0x10] sm:$0xf]
      %v588 = vld [vmem:[%s582 + $0x14] sm:$0xf]
      %v607 = vunpack.c.l.b16 %v564
      %v608 = vunpack.c.l.b16 %v565
      %v609 = vunpack.c.l.b16 %v566
      %v610 = vunpack.c.l.b16 %v567
      %v611 = vunpack.c.l.b16 %v568
      %v612 = vunpack.c.l.b16 %v569
      %v613 = vunpack.c.l.b16 %v570
      %v614 = vunpack.c.l.b16 %v571
      %v615 = vunpack.c.l.b16 %v572
      %v616 = vunpack.c.l.b16 %v573
      %v617 = vunpack.c.l.b16 %v574
      %v618 = vunpack.c.l.b16 %v575
      %v619 = vunpack.c.l.b16 %v576
      %v620 = vunpack.c.l.b16 %v577
      %v621 = vunpack.c.l.b16 %v578
      %v622 = vunpack.c.l.b16 %v579
      %v623 = vunpack.c.l.b16 %v580
      %v624 = vunpack.c.l.b16 %v581
      %v625 = vpack.c.b16 %v608, %v607
      %v626 = vpack.c.b16 %v610, %v609
      %v627 = vpack.c.b16 %v612, %v611
      %v628 = vpack.c.b16 %v614, %v613
      %v629 = vpack.c.b16 %v616, %v615
      %v630 = vpack.c.b16 %v618, %v617
      %v631 = vpack.c.b16 %v620, %v619
      %v632 = vpack.c.b16 %v622, %v621
      %v633 = vpack.c.b16 %v624, %v623
      %v640 = vunpack.c.l.b16 %v583
      %v641 = vunpack.c.l.b16 %v584
      %v642 = vunpack.c.l.b16 %v585
      %v643 = vunpack.c.l.b16 %v586
      %v644 = vunpack.c.l.b16 %v587
      %v645 = vunpack.c.l.b16 %v588
      %v646 = vpack.c.b16 %v641, %v640
      %v647 = vpack.c.b16 %v643, %v642
      %v648 = vpack.c.b16 %v645, %v644
      %v653 = vsel %vm270, %v625, 0
      %v656 = vsel %vm270, %v626, 0
      %v659 = vsel %vm270, %v627, 0
      %v662 = vsel %vm270, %v628, 0
      %v665 = vsel %vm270, %v629, 0
      %v668 = vsel %vm270, %v630, 0
      %v671 = vsel %vm270, %v631, 0
      %v674 = vsel %vm270, %v632, 0
      %v677 = vsel %vm270, %v633, 0
      %679 = vmatprep.subr.bf16.mxu0 0
      %680 = vmatpush1.bf16.msra.mxu0 %v646
      %681 = vmatprep.subr.bf16.mxu0 0
      %682 = vmatpush1.bf16.msra.mxu0 %v647
      %683 = vmatprep.subr.bf16.mxu0 0
      %684 = vmatpush1.bf16.msra.mxu0 %v648
      %685 = vmatprep.subr.bf16.mxu0 0
      %686 = vmatpush1.bf16.msra.mxu0 0
      %687 = vmatprep.subr.bf16.mxu0 0
      %688 = vmatpush1.bf16.msra.mxu0 0
      %689 = vmatprep.subr.bf16.mxu0 0
      %690 = vmatpush1.bf16.msra.mxu0 0
      %691 = vmatprep.subr.bf16.mxu0 0
      %692 = vmatpush1.bf16.msra.mxu0 0
      %693 = vmatprep.subr.bf16.mxu0 0
      %694 = vmatpush1.bf16.msra.mxu0 0
      %695 = vmatprep.subr.bf16.mxu0 0
      %696 = vmatpush1.bf16.msra.mxu0 0
      %697 = vmatprep.subr.bf16.mxu0 0
      %698 = vmatpush1.bf16.msra.mxu0 0
      %699 = vmatprep.subr.bf16.mxu0 0
      %700 = vmatpush1.bf16.msra.mxu0 0
      %701 = vmatprep.subr.bf16.mxu0 0
      %702 = vmatpush1.bf16.msra.mxu0 0
      %703 = vmatprep.subr.bf16.mxu0 0
      %704 = vmatpush1.bf16.msra.mxu0 0
      %705 = vmatprep.subr.bf16.mxu0 0
      %706 = vmatpush1.bf16.msra.mxu0 0
      %707 = vmatprep.subr.bf16.mxu0 0
      %708 = vmatpush1.bf16.msra.mxu0 0
      %709 = vmatprep.subr.bf16.mxu0 0
      %710 = vmatpush1.bf16.msra.mxu0 0
      %711 = vmatprep.mubr.bf16.mxu0 0
      %712 = vmatmul.mubr.bf16.gmra.mrb[0].mxu0 %v653
      %v713 = vpop.f32.mrb[0].mxu0
      %v714 = vadd.f32 0.0, %v713
      %v715 = vpop.f32.mrb[0].mxu0
      %v716 = vpop.f32.mrb[0].mxu0
      %v717 = vadd.f32 0.0, %v716
      %v718 = vpop.f32.mrb[0].mxu0
      %719 = vmatprep.mubr.bf16.mxu0 0
      %720 = vmatmul.mubr.bf16.gmra.mrb[0].mxu0 %v656
      %v721 = vpop.f32.mrb[0].mxu0
      %v722 = vadd.f32 0.0, %v721
      %v723 = vpop.f32.mrb[0].mxu0
      %v724 = vpop.f32.mrb[0].mxu0
      %v725 = vadd.f32 0.0, %v724
      %v726 = vpop.f32.mrb[0].mxu0
      %727 = vmatprep.mubr.bf16.mxu0 0
      %728 = vmatmul.mubr.bf16.gmra.mrb[0].mxu0 %v659
      %v729 = vpop.f32.mrb[0].mxu0
      %v730 = vadd.f32 0.0, %v729
      %v731 = vpop.f32.mrb[0].mxu0
      %v732 = vpop.f32.mrb[0].mxu0
      %v733 = vadd.f32 0.0, %v732
      %v734 = vpop.f32.mrb[0].mxu0
      %735 = vmatprep.mubr.bf16.mxu0 0
      %736 = vmatmul.mubr.bf16.gmra.mrb[0].mxu0 %v662
      %v737 = vpop.f32.mrb[0].mxu0
      %v738 = vadd.f32 0.0, %v737
      %v739 = vpop.f32.mrb[0].mxu0
      %v740 = vpop.f32.mrb[0].mxu0
      %v741 = vadd.f32 0.0, %v740
      %v742 = vpop.f32.mrb[0].mxu0
      %743 = vmatprep.mubr.bf16.mxu0 0
      %744 = vmatmul.mubr.bf16.gmra.mrb[0].mxu0 %v665
      %v745 = vpop.f32.mrb[0].mxu0
      %v746 = vadd.f32 0.0, %v745
      %v747 = vpop.f32.mrb[0].mxu0
      %v748 = vpop.f32.mrb[0].mxu0
      %v749 = vadd.f32 0.0, %v748
      %v750 = vpop.f32.mrb[0].mxu0
      %751 = vmatprep.mubr.bf16.mxu0 0
      %752 = vmatmul.mubr.bf16.gmra.mrb[0].mxu0 %v668
      %v753 = vpop.f32.mrb[0].mxu0
      %v754 = vadd.f32 0.0, %v753
      %v755 = vpop.f32.mrb[0].mxu0
      %v756 = vpop.f32.mrb[0].mxu0
      %v757 = vadd.f32 0.0, %v756
      %v758 = vpop.f32.mrb[0].mxu0
      %759 = vmatprep.mubr.bf16.mxu0 0
      %760 = vmatmul.mubr.bf16.gmra.mrb[0].mxu0 %v671
      %v761 = vpop.f32.mrb[0].mxu0
      %v762 = vadd.f32 0.0, %v761
      %v763 = vpop.f32.mrb[0].mxu0
      %v764 = vpop.f32.mrb[0].mxu0
      %v765 = vadd.f32 0.0, %v764
      %v766 = vpop.f32.mrb[0].mxu0
      %767 = vmatprep.mubr.bf16.mxu0 0
      %768 = vmatmul.mubr.bf16.gmra.mrb[0].mxu0 %v674
      %v769 = vpop.f32.mrb[0].mxu0
      %v770 = vadd.f32 0.0, %v769
      %v771 = vpop.f32.mrb[0].mxu0
      %v772 = vpop.f32.mrb[0].mxu0
      %v773 = vadd.f32 0.0, %v772
      %v774 = vpop.f32.mrb[0].mxu0
      %775 = vmatprep.mubr.bf16.mxu0 0
      %776 = vmatmul.mubr.bf16.gmra.mrb[0].mxu0 %v677
      %v777 = vpop.f32.mrb[0].mxu0
      %v778 = vadd.f32 0.0, %v777
      %v779 = vpop.f32.mrb[0].mxu0
      %v780 = vpop.f32.mrb[0].mxu0
      %v781 = vadd.f32 0.0, %v780
      %v782 = vpop.f32.mrb[0].mxu0
      %783 = vdwg.mxu0
      %v784 = vadd.f32 %v494, %v714
      %v785 = vadd.f32 %v497, %v717
      %v786 = vadd.f32 %v502, %v722
      %v787 = vadd.f32 %v505, %v725
      %v788 = vadd.f32 %v510, %v730
      %v789 = vadd.f32 %v513, %v733
      %v790 = vadd.f32 %v518, %v738
      %v791 = vadd.f32 %v521, %v741
      %v792 = vadd.f32 %v526, %v746
      %v793 = vadd.f32 %v529, %v749
      %v794 = vadd.f32 %v534, %v754
      %v795 = vadd.f32 %v537, %v757
      %v796 = vadd.f32 %v542, %v762
      %v797 = vadd.f32 %v545, %v765
      %v798 = vadd.f32 %v550, %v770
      %v799 = vadd.f32 %v553, %v773
      %v800 = vadd.f32 %v558, %v778
      %v801 = vadd.f32 %v561, %v781
      %v802 = vld [vmem:[%s2] sm:$0x1]
      %v804 = vlaneseq
      %v805 = vshrl.u32 %v804, 7
      %v806 = vsub.s32 0, %v805
      %v807 = vrot.slane %v802, %v806
      %v809 = vadd.f32 %v784, %v807
      %v810 = vadd.f32 %v785, %v807
      %v811 = vadd.f32 %v786, %v807
      %v812 = vadd.f32 %v787, %v807
      %v813 = vadd.f32 %v788, %v807
      %v814 = vadd.f32 %v789, %v807
      %v815 = vadd.f32 %v790, %v807
      %v816 = vadd.f32 %v791, %v807
      %v817 = vadd.f32 %v792, %v807
      %v818 = vadd.f32 %v793, %v807
      %v819 = vadd.f32 %v794, %v807
      %v820 = vadd.f32 %v795, %v807
      %v821 = vadd.f32 %v796, %v807
      %v822 = vadd.f32 %v797, %v807
      %v823 = vadd.f32 %v798, %v807
      %v824 = vadd.f32 %v799, %v807
      %v825 = vadd.f32 %v800, %v807
      %v826 = vadd.f32 %v801, %v807
      %vm827 = vcmp.ge.f32.partialorder %v809, 0.0
      %vm828 = vcmp.ge.f32.partialorder %v810, 0.0
      %vm829 = vcmp.ge.f32.partialorder %v811, 0.0
      %vm830 = vcmp.ge.f32.partialorder %v812, 0.0
      %vm831 = vcmp.ge.f32.partialorder %v813, 0.0
      %vm832 = vcmp.ge.f32.partialorder %v814, 0.0
      %vm833 = vcmp.ge.f32.partialorder %v815, 0.0
      %vm834 = vcmp.ge.f32.partialorder %v816, 0.0
      %vm835 = vcmp.ge.f32.partialorder %v817, 0.0
      %vm836 = vcmp.ge.f32.partialorder %v818, 0.0
      %vm837 = vcmp.ge.f32.partialorder %v819, 0.0
      %vm838 = vcmp.ge.f32.partialorder %v820, 0.0
      %vm839 = vcmp.ge.f32.partialorder %v821, 0.0
      %vm840 = vcmp.ge.f32.partialorder %v822, 0.0
      %vm841 = vcmp.ge.f32.partialorder %v823, 0.0
      %vm842 = vcmp.ge.f32.partialorder %v824, 0.0
      %vm843 = vcmp.ge.f32.partialorder %v825, 0.0
      %vm844 = vcmp.ge.f32.partialorder %v826, 0.0
      %v845 = vmul.f32 %v809, 0.1
      %v846 = vmul.f32 %v810, 0.1
      %v847 = vmul.f32 %v811, 0.1
      %v848 = vmul.f32 %v812, 0.1
      %v849 = vmul.f32 %v813, 0.1
      %v850 = vmul.f32 %v814, 0.1
      %v851 = vmul.f32 %v815, 0.1
      %v852 = vmul.f32 %v816, 0.1
      %v853 = vmul.f32 %v817, 0.1
      %v854 = vmul.f32 %v818, 0.1
      %v855 = vmul.f32 %v819, 0.1
      %v856 = vmul.f32 %v820, 0.1
      %v857 = vmul.f32 %v821, 0.1
      %v858 = vmul.f32 %v822, 0.1
      %v859 = vmul.f32 %v823, 0.1
      %v860 = vmul.f32 %v824, 0.1
      %v861 = vmul.f32 %v825, 0.1
      %v862 = vmul.f32 %v826, 0.1
      %v863 = vsel %vm827, %v809, %v845
      %v864 = vsel %vm828, %v810, %v846
      %v865 = vsel %vm829, %v811, %v847
      %v866 = vsel %vm830, %v812, %v848
      %v867 = vsel %vm831, %v813, %v849
      %v868 = vsel %vm832, %v814, %v850
      %v869 = vsel %vm833, %v815, %v851
      %v870 = vsel %vm834, %v816, %v852
      %v871 = vsel %vm835, %v817, %v853
      %v872 = vsel %vm836, %v818, %v854
      %v873 = vsel %vm837, %v819, %v855
      %v874 = vsel %vm838, %v820, %v856
      %v875 = vsel %vm839, %v821, %v857
      %v876 = vsel %vm840, %v822, %v858
      %v877 = vsel %vm841, %v823, %v859
      %v878 = vsel %vm842, %v824, %v860
      %v879 = vsel %vm843, %v825, %v861
      %v880 = vsel %vm844, %v826, %v862
      %v881 = vpack.c.bf16 %v864, %v863
      %v882 = vpack.c.bf16 %v866, %v865
      %v883 = vpack.c.bf16 %v868, %v867
      %v884 = vpack.c.bf16 %v870, %v869
      %v885 = vpack.c.bf16 %v872, %v871
      %v886 = vpack.c.bf16 %v874, %v873
      %v887 = vpack.c.bf16 %v876, %v875
      %v888 = vpack.c.bf16 %v878, %v877
      %v889 = vpack.c.bf16 %v880, %v879
      %v899 = vunpack.c.l.b16 %v881
      %v900 = vunpack.c.h.b16 %v881
      %v901 = vunpack.c.l.b16 %v882
      %v902 = vunpack.c.h.b16 %v882
      %v903 = vunpack.c.l.b16 %v883
      %v904 = vunpack.c.h.b16 %v883
      %v905 = vunpack.c.l.b16 %v884
      %v906 = vunpack.c.h.b16 %v884
      %v907 = vunpack.c.l.b16 %v885
      %v908 = vunpack.c.h.b16 %v885
      %v909 = vunpack.c.l.b16 %v886
      %v910 = vunpack.c.h.b16 %v886
      %v911 = vunpack.c.l.b16 %v887
      %v912 = vunpack.c.h.b16 %v887
      %v913 = vunpack.c.l.b16 %v888
      %v914 = vunpack.c.h.b16 %v888
      %v915 = vunpack.c.l.b16 %v889
      %v916 = vunpack.c.h.b16 %v889
      %v917 = vpack.c.b16 %v899, %v899
      %v918 = vpack.c.b16 %v900, %v900
      %v919 = vpack.c.b16 %v901, %v901
      %v920 = vpack.c.b16 %v902, %v902
      %v921 = vpack.c.b16 %v903, %v903
      %v922 = vpack.c.b16 %v904, %v904
      %v923 = vpack.c.b16 %v905, %v905
      %v924 = vpack.c.b16 %v906, %v906
      %v925 = vpack.c.b16 %v907, %v907
      %v926 = vpack.c.b16 %v908, %v908
      %v927 = vpack.c.b16 %v909, %v909
      %v928 = vpack.c.b16 %v910, %v910
      %v929 = vpack.c.b16 %v911, %v911
      %v930 = vpack.c.b16 %v912, %v912
      %v931 = vpack.c.b16 %v913, %v913
      %v932 = vpack.c.b16 %v914, %v914
      %v933 = vpack.c.b16 %v915, %v915
      %v934 = vpack.c.b16 %v916, %v916
      %vm953 = vcmask 60416
      %954 = vst.msk [vmem:[%s172] sm:$0xf] %vm953, %v917
      %955 = vst.msk [vmem:[%s172 + $0x4] sm:$0xf] %vm953, %v918
      %956 = vst.msk [vmem:[%s172 + $0x8] sm:$0xf] %vm953, %v919
      %957 = vst.msk [vmem:[%s172 + $0xc] sm:$0xf] %vm953, %v920
      %958 = vst.msk [vmem:[%s172 + $0x10] sm:$0xf] %vm953, %v921
      %959 = vst.msk [vmem:[%s172 + $0x14] sm:$0xf] %vm953, %v922
      %960 = vst.msk [vmem:[%s172 + $0x18] sm:$0xf] %vm953, %v923
      %961 = vst.msk [vmem:[%s172 + $0x1c] sm:$0xf] %vm953, %v924
      %962 = vst.msk [vmem:[%s172 + $0x20] sm:$0xf] %vm953, %v925
      %963 = vst.msk [vmem:[%s172 + $0x24] sm:$0xf] %vm953, %v926
      %964 = vst.msk [vmem:[%s172 + $0x28] sm:$0xf] %vm953, %v927
      %965 = vst.msk [vmem:[%s172 + $0x2c] sm:$0xf] %vm953, %v928
      %966 = vst.msk [vmem:[%s172 + $0x30] sm:$0xf] %vm953, %v929
      %967 = vst.msk [vmem:[%s172 + $0x34] sm:$0xf] %vm953, %v930
      %968 = vst.msk [vmem:[%s172 + $0x38] sm:$0xf] %vm953, %v931
      %969 = vst.msk [vmem:[%s172 + $0x3c] sm:$0xf] %vm953, %v932
      %970 = vst.msk [vmem:[%s172 + $0x40] sm:$0xf] %vm953, %v933
      %971 = vst.msk [vmem:[%s172 + $0x44] sm:$0xf] %vm953, %v934
      %972 = vst.msk [vmem:[%s172 + $0x48] sm:$0xf] %vm953, 0
      %973 = vst.msk [vmem:[%s172 + $0x4c] sm:$0xf] %vm953, 0
      %s974 = smul.u32 20, %s14
      %p975 = scmp.lt.s32.totalorder %s974, 159
      %s976 = scalar_select %p975, %s974, 159
      %s977 = smul.addr %s976, 4
      %s978 = scalar_lea.vmem %s3, %s977
      // Predicated region
      $region33: #{conv_block.1} parent=31 // pred_check
        %p979 = pneg %p100
      $region34: #{conv_block.1} parent=31 // pred_check_branch
        %981 = sbr.rel (%p979) target = $region36
      $region35: #{conv_block.1} parent=31 // pred_region
        %s982 = smul.u32 20, %s14
      $region36: #{conv_block.1} parent=31 // pred_fallthru
        _
    $region32: #{conv_block.1} parent=5 // pred_fallthru
      _
    %p983 = scmp.le.s32.totalorder 2, %s9
    // Predicated region
    $region37: #{conv_block.1} parent=5 // pred_check
      %p984 = pneg %p983
    $region38: #{conv_block.1} parent=5 // pred_check_branch
      %986 = sbr.rel (%p984) target = $region40
    $region39: #{conv_block.1} parent=5 // pred_region
      %s987 = ssub.s32 %s9, 2
      // Predicated region
      $region41: #{conv_block.1} parent=39 // pred_check
        %p988 = pneg %p106
      $region42: #{conv_block.1} parent=39 // pred_check_branch
        %990 = sbr.rel (%p988) target = $region44
      $region43: #{conv_block.1} parent=39 // pred_region
        %s991 = smul.u32 20, %s15
        %p992 = scmp.lt.s32.totalorder %s991, 159
        %s993 = scalar_select %p992, %s991, 159
        %s994 = smul.addr %s993, 4
        %s995 = scalar_lea.vmem %s3, %s994
      $region44: #{conv_block.1} parent=39 // pred_fallthru
        _
    $region40: #{conv_block.1} parent=5 // pred_fallthru
      _
  $region6: #{conv_block.1} parent=0 // loop_footer
    %s13 = sadd.s32 1, %s9
  $region7: #{conv_block.1} parent=0 // loop_footer_branch
    %8 = sbr.rel target = $region3
  $region8: #{conv_block.1} parent=0 // loop_exit
    _

</llo_original>
